<compile_context>
chip_gen: v7x
topology: tpu7x:2x2x1
jax: 0.10.0
libtpu: 0.0.40
codegen_flags: <defaults>
</compile_context>

<pallas_src>
import jax
import jax.numpy as jnp
from jax.experimental import pallas as pl
from jax.experimental.pallas import tpu as pltpu


def _pick_tile(dim, target, mult):
    """Largest divisor of `dim` that is <= target and a multiple of `mult`.

    Falls back to `dim` itself (a full-extent block is always legal)."""
    for cand in range(min(target, dim), mult - 1, -1):
        if dim % cand == 0 and cand % mult == 0:
            return cand
    return dim


def _llama_mlp_kernel(x_ref, wgu_ref, wd_ref, out_ref, stats_ref):
    """One (token tile i, intermediate tile j) grid step.

    x_ref    : [TM, H]     bf16
    wgu_ref  : [H, 2*TI]   bf16  (gate cols || up cols for intermediate tile j)
    wd_ref   : [TI, H]     bf16
    out_ref  : [TM, H]     f32   resident across j -> used as the accumulator
    stats_ref: [1, 4, TI]  f32   (sum, sumsq, max, min partials of gate)
    """
    j = pl.program_id(1)
    tm = x_ref.shape[0]
    ti = wd_ref.shape[0]

    # Fused gate|up projection on the MXU with f32 accumulation.
    gu = jnp.dot(x_ref[...], wgu_ref[...],
                 preferred_element_type=jnp.float32)            # [TM, 2*TI]
    gate = gu[:, :ti]
    up = gu[:, ti:]

    # Per-tile partial statistics of the gate activations.
    # sum / sum-of-squares via a tiny ones-matmul (MXU, negligible vs. the
    # main gemms: ~8/H of their flops); max / min on the XLU.
    ones8 = jnp.ones((8, tm), jnp.float32)
    gsum = jnp.dot(ones8, gate, preferred_element_type=jnp.float32)[0:1]        # [1, TI]
    gsq = jnp.dot(ones8, gate * gate, preferred_element_type=jnp.float32)[0:1]  # [1, TI]
    gmax = jnp.max(gate, axis=0, keepdims=True)                                 # [1, TI]
    gmin = jnp.min(gate, axis=0, keepdims=True)                                 # [1, TI]
    stats_ref[0] = jnp.concatenate([gsum, gsq, gmax, gmin], axis=0)             # [4, TI]

    # SiLU gating in f32 (VPU/EUP), cast to bf16 for the down-proj matmul.
    inter = (gate * jax.lax.logistic(gate) * up).astype(wd_ref.dtype)           # [TM, TI]

    contrib = jnp.dot(inter, wd_ref[...], preferred_element_type=jnp.float32)   # [TM, H]

    @pl.when(j == 0)
    def _():
        out_ref[...] = contrib

    @pl.when(j > 0)
    def _():
        out_ref[...] += contrib


@jax.jit
def _mlp_pallas(x, w_gu, w_d):
    """x: [T, H] bf16; w_gu: [nI, H, 2*TI] bf16; w_d: [I, H] bf16.

    Returns (out [T, H] f32, stats [nT, 4, I] f32 per-token-tile partials)."""
    T, H = x.shape
    nI, _, two_ti = w_gu.shape
    TI = two_ti // 2
    I = nI * TI
    TM = _pick_tile(T, 256, 8)
    nT = T // TM

    out_shapes = (
        jax.ShapeDtypeStruct((T, H), jnp.float32),        # MLP output
        jax.ShapeDtypeStruct((nT, 4, I), jnp.float32),    # gate stats partials
    )
    grid_spec = pltpu.PrefetchScalarGridSpec(
        num_scalar_prefetch=0,
        grid=(nT, nI),
        in_specs=[
            pl.BlockSpec((TM, H), lambda i, j: (i, 0)),               # x tile (fetched once per i)
            pl.BlockSpec((None, H, 2 * TI), lambda i, j: (j, 0, 0)),  # gate||up slab
            pl.BlockSpec((TI, H), lambda i, j: (j, 0)),               # down slab
        ],
        out_specs=[
            pl.BlockSpec((TM, H), lambda i, j: (i, 0)),               # resident accumulator
            pl.BlockSpec((1, 4, TI), lambda i, j: (i, 0, j)),         # stats partials
        ],
    )
    cost = pl.CostEstimate(
        flops=int(2 * T * H * (2 * I) + 2 * T * I * H),
        transcendentals=int(T * I),
        bytes_accessed=int(2 * (x.size + w_gu.size + w_d.size)
                           + 4 * T * H + 4 * nT * 4 * I),
    )
    return pl.pallas_call(
        _llama_mlp_kernel,
        out_shape=out_shapes,
        grid_spec=grid_spec,
        compiler_params=pltpu.CompilerParams(
            dimension_semantics=("parallel", "arbitrary"),
            vmem_limit_bytes=48 * 1024 * 1024,
        ),
        cost_estimate=cost,
    )(x, w_gu, w_d)


def prepare_params(params, *, ti_target=512, dtype=jnp.bfloat16):
    """One-time repack of PyTorch-layout weights into the kernel layout.

    params: gate [I,H], up [I,H], down [H,I]   (nn.Linear weight layout)
    Returns dict with
      w_gu : [nI, H, 2*TI]  per-intermediate-tile gate||up slabs (bf16)
      w_d  : [I, H]         down projection, contraction-major (bf16)
    """
    I, H = params["gate"].shape
    TI = _pick_tile(I, ti_target, 128)
    nI = I // TI
    wg = params["gate"].T.reshape(H, nI, TI).transpose(1, 0, 2)   # [nI, H, TI]
    wu = params["up"].T.reshape(H, nI, TI).transpose(1, 0, 2)     # [nI, H, TI]
    w_gu = jnp.concatenate([wg, wu], axis=-1).astype(dtype)       # [nI, H, 2*TI]
    w_d = params["down"].T.astype(dtype)                          # [I, H]
    return dict(w_gu=w_gu, w_d=w_d)


def llama_mlp_forward(hidden_states, prepared, state):
    """Functional equivalent of LlamaMLP_.forward.

    hidden_states: [B, S, H]; prepared: output of prepare_params();
    state: running-stat buffers.  Returns (output [B,S,H] f32, new_state)."""
    B, S, H = hidden_states.shape
    T = B * S
    x_flat = hidden_states.reshape(T, H).astype(jnp.bfloat16)

    out_flat, stats = _mlp_pallas(x_flat, prepared["w_gu"], prepared["w_d"])

    # Combine per-token-tile partials (nT rows: trivially cheap in plain JAX).
    gsum = stats[:, 0, :].sum(0)
    gsq = stats[:, 1, :].sum(0)
    gmax = stats[:, 2, :].max(0)
    gmin = stats[:, 3, :].min(0)

    # Running-statistic updates (mirrors the PyTorch buffer arithmetic).
    bn = state["batch_num"] + 1.0
    mean = (bn - 1.0) / bn * state["mean"] + gsum / bn / T
    square_mean = (bn - 1.0) / bn * state["square_mean"] + gsq / bn / T
    std = jnp.sqrt(jnp.maximum(square_mean - mean * mean, 0.0))
    new_max = jnp.where(gmax > state["max"], gmax, state["max"])
    new_min = jnp.where(gmin < state["min"], gmin, state["min"])

    new_state = dict(batch_num=bn, mean=mean, square_mean=square_mean,
                     std=std, max=new_max, min=new_min)
    return out_flat.reshape(B, S, H), new_state


def init_state(intermediate_size, dtype=jnp.float32):
    # Zero-initialized to mirror the PyTorch module's buffers exactly.
    z = jnp.zeros((intermediate_size,), dtype)
    return dict(batch_num=0.0, mean=z, square_mean=z, std=z, max=z, min=z)


if __name__ == "__main__":
    # Small shapes consistent with a Llama MLP: batch=2, seq=8, hidden=128,
    # intermediate=256 (multiples of (8,128) for clean TPU tiling).
    B, S, H, I = 2, 8, 128, 256

    key = jax.random.PRNGKey(0)
    kx, kg, ku, kd = jax.random.split(key, 4)
    x = jax.random.normal(kx, (B, S, H), jnp.float32)
    params = dict(
        gate=jax.random.normal(kg, (I, H), jnp.float32) * (1.0 / H) ** 0.5,
        up=jax.random.normal(ku, (I, H), jnp.float32) * (1.0 / H) ** 0.5,
        down=jax.random.normal(kd, (H, I), jnp.float32) * (1.0 / I) ** 0.5,
    )
    prepared = prepare_params(params)
    state = init_state(I)

    out, new_state = llama_mlp_forward(x, prepared, state)
    jax.block_until_ready(out)
    jax.block_until_ready(new_state["std"])

    # Correctness check against a pure-JAX f32 reference (loose tolerance:
    # the kernel streams activations/weights in bf16 with f32 accumulation).
    xf = x.reshape(-1, H)
    gate_ref = xf @ params["gate"].T
    up_ref = xf @ params["up"].T
    out_ref = (jax.nn.silu(gate_ref) * up_ref) @ params["down"].T
    assert jnp.allclose(out.reshape(-1, H), out_ref, rtol=5e-2, atol=1e-1)
    assert jnp.allclose(new_state["mean"], gate_ref.mean(0), rtol=5e-2, atol=5e-2)
    assert jnp.allclose(new_state["max"], jnp.maximum(gate_ref.max(0), 0.0),
                        rtol=5e-2, atol=5e-2)
    assert jnp.allclose(new_state["min"], jnp.minimum(gate_ref.min(0), 0.0),
                        rtol=5e-2, atol=5e-2)

    print("KERNEL_OK")
</pallas_src>

<mosaic_0001>
module attributes {stable_mosaic.version = 11 : i64} {
  func.func @_llama_mlp_kernel(%arg0: i32, %arg1: i32, %arg2: memref<16x128xbf16, #tpu.memory_space<vmem>>, %arg3: memref<1x128x512xbf16, #tpu.memory_space<vmem>>, %arg4: memref<256x128xbf16, #tpu.memory_space<vmem>>, %arg5: memref<16x128xf32, #tpu.memory_space<vmem>>, %arg6: memref<1x4x256xf32, #tpu.memory_space<vmem>>) attributes {dimension_semantics = [#tpu.dimension_semantics<parallel>, #tpu.dimension_semantics<arbitrary>], iteration_bounds = array<i64: 1, 1>, scalar_prefetch = 0 : i64, scratch_operands = 0 : i64, tpu.core_type = #tpu.core_type<tc>, window_params = [{transform_indices = @transform_0, window_bounds = array<i64: 16, 128>}, {transform_indices = @transform_1, window_bounds = array<i64: 1, 128, 512>}, {transform_indices = @transform_2, window_bounds = array<i64: 256, 128>}, {transform_indices = @transform_3, window_bounds = array<i64: 16, 128>}, {transform_indices = @transform_4, window_bounds = array<i64: 1, 4, 256>}]} {
    %c0 = arith.constant 0 : index
    %c0_0 = arith.constant 0 : index
    %0 = vector.load %arg2[%c0, %c0_0] : memref<16x128xbf16, #tpu.memory_space<vmem>>, vector<16x128xbf16>
    %c0_1 = arith.constant 0 : index
    %c0_2 = arith.constant 0 : index
    %c0_3 = arith.constant 0 : index
    %1 = vector.load %arg3[%c0_1, %c0_2, %c0_3] : memref<1x128x512xbf16, #tpu.memory_space<vmem>>, vector<1x128x512xbf16>
    %2 = vector.shape_cast %1 : vector<1x128x512xbf16> to vector<128x512xbf16>
    %cst = arith.constant dense<0.000000e+00> : vector<16x512xf32>
    %3 = tpu.matmul %0, %2, %cst {dimension_numbers = #tpu.dot_dimension_numbers<[1], [0], [0], [1], [0, 0, 1, 1], [], []>} : vector<16x128xbf16>, vector<128x512xbf16>, vector<16x512xf32> -> vector<16x512xf32>
    %4 = vector.extract_strided_slice %3 {offsets = [0, 0], sizes = [16, 256], strides = [1, 1]} : vector<16x512xf32> to vector<16x256xf32>
    %5 = vector.extract_strided_slice %3 {offsets = [0, 256], sizes = [16, 256], strides = [1, 1]} : vector<16x512xf32> to vector<16x256xf32>
    %cst_4 = arith.constant 1.000000e+00 : f32
    %6 = vector.broadcast %cst_4 : f32 to vector<8x16xf32>
    %cst_5 = arith.constant dense<0.000000e+00> : vector<8x256xf32>
    %7 = tpu.matmul %6, %4, %cst_5 {dimension_numbers = #tpu.dot_dimension_numbers<[1], [0], [0], [1], [0, 0, 1, 1], [], []>} : vector<8x16xf32>, vector<16x256xf32>, vector<8x256xf32> -> vector<8x256xf32>
    %8 = vector.extract_strided_slice %7 {offsets = [0, 0], sizes = [1, 256], strides = [1, 1]} : vector<8x256xf32> to vector<1x256xf32>
    %9 = arith.mulf %4, %4 : vector<16x256xf32>
    %cst_6 = arith.constant dense<0.000000e+00> : vector<8x256xf32>
    %10 = tpu.matmul %6, %9, %cst_6 {dimension_numbers = #tpu.dot_dimension_numbers<[1], [0], [0], [1], [0, 0, 1, 1], [], []>} : vector<8x16xf32>, vector<16x256xf32>, vector<8x256xf32> -> vector<8x256xf32>
    %11 = vector.extract_strided_slice %10 {offsets = [0, 0], sizes = [1, 256], strides = [1, 1]} : vector<8x256xf32> to vector<1x256xf32>
    %cst_7 = arith.constant dense<0xFF800000> : vector<256xf32>
    %12 = vector.multi_reduction <maximumf>, %4, %cst_7 [0] : vector<16x256xf32> to vector<256xf32>
    %13 = vector.shape_cast %12 : vector<256xf32> to vector<1x256xf32>
    %cst_8 = arith.constant dense<0x7F800000> : vector<256xf32>
    %14 = vector.multi_reduction <minimumf>, %4, %cst_8 [0] : vector<16x256xf32> to vector<256xf32>
    %15 = vector.shape_cast %14 : vector<256xf32> to vector<1x256xf32>
    %16 = tpu.concatenate %8, %11, %13, %15 in 0 : vector<1x256xf32>, vector<1x256xf32>, vector<1x256xf32>, vector<1x256xf32> -> vector<4x256xf32>
    %c0_9 = arith.constant 0 : index
    %c0_10 = arith.constant 0 : index
    %c0_11 = arith.constant 0 : index
    %17 = vector.load %arg6[%c0_9, %c0_10, %c0_11] : memref<1x4x256xf32, #tpu.memory_space<vmem>>, vector<1x4x256xf32>
    %18 = vector.shape_cast %17 : vector<1x4x256xf32> to vector<4x256xf32>
    %19 = vector.shape_cast %16 : vector<4x256xf32> to vector<1x4x256xf32>
    tpu.vector_store %arg6[%c0_9, %c0_10, %c0_11], %19 {strides = array<i32>} : memref<1x4x256xf32, #tpu.memory_space<vmem>>, vector<1x4x256xf32>,
    %20 = arith.negf %4 : vector<16x256xf32>
    %21 = math.exp %20 : vector<16x256xf32>
    %cst_12 = arith.constant 1.000000e+00 : f32
    %22 = vector.broadcast %cst_12 : f32 to vector<16x256xf32>
    %23 = arith.addf %22, %21 : vector<16x256xf32>
    %24 = arith.divf %22, %23 : vector<16x256xf32>
    %25 = arith.mulf %4, %24 : vector<16x256xf32>
    %26 = arith.mulf %25, %5 : vector<16x256xf32>
    %27 = arith.truncf %26 : vector<16x256xf32> to vector<16x256xbf16>
    %c0_13 = arith.constant 0 : index
    %c0_14 = arith.constant 0 : index
    %28 = vector.load %arg4[%c0_13, %c0_14] : memref<256x128xbf16, #tpu.memory_space<vmem>>, vector<256x128xbf16>
    %cst_15 = arith.constant dense<0.000000e+00> : vector<16x128xf32>
    %29 = tpu.matmul %27, %28, %cst_15 {dimension_numbers = #tpu.dot_dimension_numbers<[1], [0], [0], [1], [0, 0, 1, 1], [], []>} : vector<16x256xbf16>, vector<256x128xbf16>, vector<16x128xf32> -> vector<16x128xf32>
    %c0_i32 = arith.constant 0 : i32
    %30 = arith.cmpi eq, %arg1, %c0_i32 : i32
    %31 = arith.extui %30 : i1 to i32
    %c0_i32_16 = arith.constant 0 : i32
    %32 = arith.cmpi ne, %31, %c0_i32_16 : i32
    scf.if %32 {
      %c0_19 = arith.constant 0 : index
      %c0_20 = arith.constant 0 : index
      %36 = vector.load %arg5[%c0_19, %c0_20] : memref<16x128xf32, #tpu.memory_space<vmem>>, vector<16x128xf32>
      tpu.vector_store %arg5[%c0_19, %c0_20], %29 {strides = array<i32>} : memref<16x128xf32, #tpu.memory_space<vmem>>, vector<16x128xf32>,
    } else {
    }
    %c0_i32_17 = arith.constant 0 : i32
    %33 = arith.cmpi sgt, %arg1, %c0_i32_17 : i32
    %34 = arith.extui %33 : i1 to i32
    %c0_i32_18 = arith.constant 0 : i32
    %35 = arith.cmpi ne, %34, %c0_i32_18 : i32
    scf.if %35 {
      %c0_19 = arith.constant 0 : index
      %c0_20 = arith.constant 0 : index
      %36 = vector.load %arg5[%c0_19, %c0_20] : memref<16x128xf32, #tpu.memory_space<vmem>>, vector<16x128xf32>
      %37 = arith.addf %36, %29 : vector<16x128xf32>
      %c0_21 = arith.constant 0 : index
      %c0_22 = arith.constant 0 : index
      %38 = vector.load %arg5[%c0_21, %c0_22] : memref<16x128xf32, #tpu.memory_space<vmem>>, vector<16x128xf32>
      tpu.vector_store %arg5[%c0_21, %c0_22], %37 {strides = array<i32>} : memref<16x128xf32, #tpu.memory_space<vmem>>, vector<16x128xf32>,
    } else {
    }
    return
  }
  func.func @transform_0(%arg0: i32, %arg1: i32) -> (i32, i32) {
    %c0_i32 = arith.constant 0 : i32
    %c0_i32_0 = arith.constant 0 : i32
    return %arg0, %c0_i32 : i32, i32
  }
  func.func @transform_1(%arg0: i32, %arg1: i32) -> (i32, i32, i32) {
    %c0_i32 = arith.constant 0 : i32
    %c0_i32_0 = arith.constant 0 : i32
    %c0_i32_1 = arith.constant 0 : i32
    return %arg1, %c0_i32, %c0_i32_0 : i32, i32, i32
  }
  func.func @transform_2(%arg0: i32, %arg1: i32) -> (i32, i32) {
    %c0_i32 = arith.constant 0 : i32
    %c0_i32_0 = arith.constant 0 : i32
    return %arg1, %c0_i32 : i32, i32
  }
  func.func @transform_3(%arg0: i32, %arg1: i32) -> (i32, i32) {
    %c0_i32 = arith.constant 0 : i32
    %c0_i32_0 = arith.constant 0 : i32
    return %arg0, %c0_i32 : i32, i32
  }
  func.func @transform_4(%arg0: i32, %arg1: i32) -> (i32, i32, i32) {
    %c0_i32 = arith.constant 0 : i32
    %c0_i32_0 = arith.constant 0 : i32
    return %arg0, %c0_i32, %arg1 : i32, i32, i32
  }
}

</mosaic_0001>

<llo_original>
// kernel: _mlp_pallas.1
$region0: #{_mlp_pallas.1}
  #allocation0 [shape = 'u32[]', space=smem, size = 0x4, offset = 0x4, fixed_abs, tag = 'smem constant byte address 0x4 - core index']
  #allocation1 [shape = 'u32[144,128]{1,0:T(1,128)}', space=vmem, size = 0x12000, scoped, tag = 'internal scratch']
  %s0 = inlined_call_operand.hbm [shape: bf16[16,128], index: 0, kind: input, shape index: {}]
  %s1 = inlined_call_operand.hbm [shape: bf16[1,128,512], index: 1, kind: input, shape index: {}]
  %s2 = inlined_call_operand.hbm [shape: bf16[256,128], index: 2, kind: input, shape index: {}]
  %s3 = inlined_call_operand.hbm [shape: f32[16,128], index: 3, kind: output, shape index: {0}]
  %s4 = inlined_call_operand.hbm [shape: f32[1,4,256], index: 4, kind: output, shape index: {1}]
  %5 = xla_tuple %s3, %s4
  %s6 = sld [smem:[#allocation0]]
  $region50: #{_mlp_pallas.1} parent=0
    _
  %s8 = ssub.s32 1, %s6
  %s9 = scalar_select 0, %s8, %s6
  $region1: #{_mlp_pallas.1} parent=0
    #allocation2 [shape = 'u8[4096]{0}', space=vmem, size = 0x1000, scoped, tag = 'input window, operand 0, single buffered']
    #allocation3 [shape = 's32[1]{0}', space=sflag, size = 0x4, scoped, tag = 'scoped memory for _mlp_pallas.1']
    #allocation4 [shape = 's32[1]{0}', space=sflag, size = 0x4, scoped, tag = 'scoped memory for _mlp_pallas.1']
    #allocation5 [shape = 'u8[131072]{0}', space=vmem, size = 0x20000, scoped, tag = 'input window, operand 1, single buffered']
    #allocation6 [shape = 's32[1]{0}', space=sflag, size = 0x4, scoped, tag = 'scoped memory for _mlp_pallas.1']
    #allocation7 [shape = 'u8[65536]{0}', space=vmem, size = 0x10000, scoped, tag = 'input window, operand 2, single buffered']
    #allocation8 [shape = 'u8[8192]{0}', space=vmem, size = 0x2000, scoped, tag = 'output window, operand 0, single buffered']
    #allocation9 [shape = 'u8[4096]{0}', space=vmem, size = 0x1000, scoped, tag = 'output window, operand 1, single buffered']
    #allocation10 [shape = 's32[1]{0}', space=sflag, size = 0x4, scoped, tag = 'scoped memory for _mlp_pallas.1']
    %10 = vsyncpa [#allocation3], 0
    %11 = vsyncpa [#allocation6], 0
    %12 = vsyncpa [#allocation4], 0
    %13 = vsyncpa [#allocation10], 0
    // Predicated region
    $region2: #{_mlp_pallas.1} parent=1 // pred_check
      _
    $region3: #{_mlp_pallas.1} parent=1 // pred_check_branch
      %15 = sbr.rel (0) target = $region5
    $region4: #{_mlp_pallas.1} parent=1 // pred_region
      %s17 = ssub.s32 128, 128
      %18 = vsyncadd [#allocation3], %s17
      %s19 = sshll.u32 [#allocation2], 4
      %s20 = int_to_ptr.vmem [resolvable:$true] %s19
      %25 = dma.hbm_to_vmem [thread:$0]  %s0, 128, %s20, [#allocation3], 64, 64, 4
    $region5: #{_mlp_pallas.1} parent=1 // pred_fallthru
      _
    // Predicated region
    $region6: #{_mlp_pallas.1} parent=1 // pred_check
      _
    $region7: #{_mlp_pallas.1} parent=1 // pred_check_branch
      %27 = sbr.rel (0) target = $region9
    $region8: #{_mlp_pallas.1} parent=1 // pred_region
      %s29 = ssub.s32 4096, 4096
      %30 = vsyncadd [#allocation6], %s29
      %s31 = sshll.u32 [#allocation5], 4
      %s32 = int_to_ptr.vmem [resolvable:$true] %s31
      %37 = dma.hbm_to_vmem [thread:$0]  %s1, 4096, %s32, [#allocation6], 256, 256, 16
    $region9: #{_mlp_pallas.1} parent=1 // pred_fallthru
      _
    // Predicated region
    $region10: #{_mlp_pallas.1} parent=1 // pred_check
      _
    $region11: #{_mlp_pallas.1} parent=1 // pred_check_branch
      %39 = sbr.rel (0) target = $region13
    $region12: #{_mlp_pallas.1} parent=1 // pred_region
      %s41 = ssub.s32 2048, 2048
      %42 = vsyncadd [#allocation6], %s41
      %s43 = sshll.u32 [#allocation7], 4
      %s44 = int_to_ptr.vmem [resolvable:$true] %s43
      %49 = dma.hbm_to_vmem [thread:$0]  %s2, 2048, %s44, [#allocation6], 64, 64, 4
    $region13: #{_mlp_pallas.1} parent=1 // pred_fallthru
      _
    // Predicated region
    $region14: #{_mlp_pallas.1} parent=1 // pred_check
      _
    $region15: #{_mlp_pallas.1} parent=1 // pred_check_branch
      %51 = sbr.rel (0) target = $region17
    $region16: #{_mlp_pallas.1} parent=1 // pred_region
      %52 = dma.done [#allocation3], 128
    $region17: #{_mlp_pallas.1} parent=1 // pred_fallthru
      _
    // Predicated region
    $region18: #{_mlp_pallas.1} parent=1 // pred_check
      _
    $region19: #{_mlp_pallas.1} parent=1 // pred_check_branch
      %54 = sbr.rel (0) target = $region21
    $region20: #{_mlp_pallas.1} parent=1 // pred_region
      %55 = dma.done [#allocation6], 4096
    $region21: #{_mlp_pallas.1} parent=1 // pred_fallthru
      _
    // Predicated region
    $region22: #{_mlp_pallas.1} parent=1 // pred_check
      _
    $region23: #{_mlp_pallas.1} parent=1 // pred_check_branch
      %57 = sbr.rel (0) target = $region25
    $region24: #{_mlp_pallas.1} parent=1 // pred_region
      %58 = dma.done [#allocation6], 2048
    $region25: #{_mlp_pallas.1} parent=1 // pred_fallthru
      _
    %v60 = vld [vmem:[#allocation2] sm:$0xf]
    %v61 = vld [vmem:[#allocation2 + $0x4] sm:$0xf]
    %v62 = vld [vmem:[#allocation5] sm:$0xff]
    %v63 = vld [vmem:[#allocation5 + $0x8] sm:$0xff]
    %v64 = vld [vmem:[#allocation5 + $0x10] sm:$0xff]
    %v65 = vld [vmem:[#allocation5 + $0x18] sm:$0xff]
    %v66 = vld [vmem:[#allocation5 + $0x20] sm:$0xff]
    %v67 = vld [vmem:[#allocation5 + $0x28] sm:$0xff]
    %v68 = vld [vmem:[#allocation5 + $0x30] sm:$0xff]
    %v69 = vld [vmem:[#allocation5 + $0x38] sm:$0xff]
    %v70 = vld [vmem:[#allocation5 + $0x40] sm:$0xff]
    %v71 = vld [vmem:[#allocation5 + $0x48] sm:$0xff]
    %v72 = vld [vmem:[#allocation5 + $0x50] sm:$0xff]
    %v73 = vld [vmem:[#allocation5 + $0x58] sm:$0xff]
    %v74 = vld [vmem:[#allocation5 + $0x60] sm:$0xff]
    %v75 = vld [vmem:[#allocation5 + $0x68] sm:$0xff]
    %v76 = vld [vmem:[#allocation5 + $0x70] sm:$0xff]
    %v77 = vld [vmem:[#allocation5 + $0x78] sm:$0xff]
    %v78 = vld [vmem:[#allocation5 + $0x80] sm:$0xff]
    %v79 = vld [vmem:[#allocation5 + $0x88] sm:$0xff]
    %v80 = vld [vmem:[#allocation5 + $0x90] sm:$0xff]
    %v81 = vld [vmem:[#allocation5 + $0x98] sm:$0xff]
    %v82 = vld [vmem:[#allocation5 + $0xa0] sm:$0xff]
    %v83 = vld [vmem:[#allocation5 + $0xa8] sm:$0xff]
    %v84 = vld [vmem:[#allocation5 + $0xb0] sm:$0xff]
    %v85 = vld [vmem:[#allocation5 + $0xb8] sm:$0xff]
    %v86 = vld [vmem:[#allocation5 + $0xc0] sm:$0xff]
    %v87 = vld [vmem:[#allocation5 + $0xc8] sm:$0xff]
    %v88 = vld [vmem:[#allocation5 + $0xd0] sm:$0xff]
    %v89 = vld [vmem:[#allocation5 + $0xd8] sm:$0xff]
    %v90 = vld [vmem:[#allocation5 + $0xe0] sm:$0xff]
    %v91 = vld [vmem:[#allocation5 + $0xe8] sm:$0xff]
    %v92 = vld [vmem:[#allocation5 + $0xf0] sm:$0xff]
    %v93 = vld [vmem:[#allocation5 + $0xf8] sm:$0xff]
    %v96 = vunpack.c.l.b16 %v60
    %v97 = vunpack.c.l.b16 %v61
    %v98 = vpack.c.b16 %v97, %v96
    %v132 = vunpack.c.l.b16 %v62
    %v133 = vunpack.c.h.b16 %v62
    %v134 = vunpack.c.l.b16 %v63
    %v135 = vunpack.c.h.b16 %v63
    %v136 = vunpack.c.l.b16 %v64
    %v137 = vunpack.c.h.b16 %v64
    %v138 = vunpack.c.l.b16 %v65
    %v139 = vunpack.c.h.b16 %v65
    %v140 = vunpack.c.l.b16 %v66
    %v141 = vunpack.c.h.b16 %v66
    %v142 = vunpack.c.l.b16 %v67
    %v143 = vunpack.c.h.b16 %v67
    %v144 = vunpack.c.l.b16 %v68
    %v145 = vunpack.c.h.b16 %v68
    %v146 = vunpack.c.l.b16 %v69
    %v147 = vunpack.c.h.b16 %v69
    %v148 = vunpack.c.l.b16 %v70
    %v149 = vunpack.c.h.b16 %v70
    %v150 = vunpack.c.l.b16 %v71
    %v151 = vunpack.c.h.b16 %v71
    %v152 = vunpack.c.l.b16 %v72
    %v153 = vunpack.c.h.b16 %v72
    %v154 = vunpack.c.l.b16 %v73
    %v155 = vunpack.c.h.b16 %v73
    %v156 = vunpack.c.l.b16 %v74
    %v157 = vunpack.c.h.b16 %v74
    %v158 = vunpack.c.l.b16 %v75
    %v159 = vunpack.c.h.b16 %v75
    %v160 = vunpack.c.l.b16 %v76
    %v161 = vunpack.c.h.b16 %v76
    %v162 = vunpack.c.l.b16 %v77
    %v163 = vunpack.c.h.b16 %v77
    %v164 = vunpack.c.l.b16 %v78
    %v165 = vunpack.c.h.b16 %v78
    %v166 = vunpack.c.l.b16 %v79
    %v167 = vunpack.c.h.b16 %v79
    %v168 = vunpack.c.l.b16 %v80
    %v169 = vunpack.c.h.b16 %v80
    %v170 = vunpack.c.l.b16 %v81
    %v171 = vunpack.c.h.b16 %v81
    %v172 = vunpack.c.l.b16 %v82
    %v173 = vunpack.c.h.b16 %v82
    %v174 = vunpack.c.l.b16 %v83
    %v175 = vunpack.c.h.b16 %v83
    %v176 = vunpack.c.l.b16 %v84
    %v177 = vunpack.c.h.b16 %v84
    %v178 = vunpack.c.l.b16 %v85
    %v179 = vunpack.c.h.b16 %v85
    %v180 = vunpack.c.l.b16 %v86
    %v181 = vunpack.c.h.b16 %v86
    %v182 = vunpack.c.l.b16 %v87
    %v183 = vunpack.c.h.b16 %v87
    %v184 = vunpack.c.l.b16 %v88
    %v185 = vunpack.c.h.b16 %v88
    %v186 = vunpack.c.l.b16 %v89
    %v187 = vunpack.c.h.b16 %v89
    %v188 = vunpack.c.l.b16 %v90
    %v189 = vunpack.c.h.b16 %v90
    %v190 = vunpack.c.l.b16 %v91
    %v191 = vunpack.c.h.b16 %v91
    %v192 = vunpack.c.l.b16 %v92
    %v193 = vunpack.c.h.b16 %v92
    %v194 = vunpack.c.l.b16 %v93
    %v195 = vunpack.c.h.b16 %v93
    %v196 = vpack.c.b16 %v136, %v132
    %v197 = vpack.c.b16 %v137, %v133
    %v198 = vpack.c.b16 %v138, %v134
    %v199 = vpack.c.b16 %v139, %v135
    %v200 = vpack.c.b16 %v144, %v140
    %v201 = vpack.c.b16 %v145, %v141
    %v202 = vpack.c.b16 %v146, %v142
    %v203 = vpack.c.b16 %v147, %v143
    %v204 = vpack.c.b16 %v152, %v148
    %v205 = vpack.c.b16 %v153, %v149
    %v206 = vpack.c.b16 %v154, %v150
    %v207 = vpack.c.b16 %v155, %v151
    %v208 = vpack.c.b16 %v160, %v156
    %v209 = vpack.c.b16 %v161, %v157
    %v210 = vpack.c.b16 %v162, %v158
    %v211 = vpack.c.b16 %v163, %v159
    %v212 = vpack.c.b16 %v168, %v164
    %v213 = vpack.c.b16 %v169, %v165
    %v214 = vpack.c.b16 %v170, %v166
    %v215 = vpack.c.b16 %v171, %v167
    %v216 = vpack.c.b16 %v176, %v172
    %v217 = vpack.c.b16 %v177, %v173
    %v218 = vpack.c.b16 %v178, %v174
    %v219 = vpack.c.b16 %v179, %v175
    %v220 = vpack.c.b16 %v184, %v180
    %v221 = vpack.c.b16 %v185, %v181
    %v222 = vpack.c.b16 %v186, %v182
    %v223 = vpack.c.b16 %v187, %v183
    %v224 = vpack.c.b16 %v192, %v188
    %v225 = vpack.c.b16 %v193, %v189
    %v226 = vpack.c.b16 %v194, %v190
    %v227 = vpack.c.b16 %v195, %v191
    %260 = vmatprep.subr.bf16.mxu0 %v197
    %261 = vmatpush1.bf16.msra.mxu0 %v196
    %262 = vmatprep.subr.bf16.mxu0 %v201
    %263 = vmatpush1.bf16.msra.mxu0 %v200
    %264 = vmatprep.subr.bf16.mxu0 %v205
    %265 = vmatpush1.bf16.msra.mxu0 %v204
    %266 = vmatprep.subr.bf16.mxu0 %v209
    %267 = vmatpush1.bf16.msra.mxu0 %v208
    %268 = vmatprep.subr.bf16.mxu0 %v213
    %269 = vmatpush1.bf16.msra.mxu0 %v212
    %270 = vmatprep.subr.bf16.mxu0 %v217
    %271 = vmatpush1.bf16.msra.mxu0 %v216
    %272 = vmatprep.subr.bf16.mxu0 %v221
    %273 = vmatpush1.bf16.msra.mxu0 %v220
    %274 = vmatprep.subr.bf16.mxu0 %v225
    %275 = vmatpush1.bf16.msra.mxu0 %v224
    %276 = vmatprep.subr.bf16.mxu0 0
    %277 = vmatpush1.bf16.msra.mxu0 0
    %278 = vmatprep.subr.bf16.mxu0 0
    %279 = vmatpush1.bf16.msra.mxu0 0
    %280 = vmatprep.subr.bf16.mxu0 0
    %281 = vmatpush1.bf16.msra.mxu0 0
    %282 = vmatprep.subr.bf16.mxu0 0
    %283 = vmatpush1.bf16.msra.mxu0 0
    %284 = vmatprep.subr.bf16.mxu0 0
    %285 = vmatpush1.bf16.msra.mxu0 0
    %286 = vmatprep.subr.bf16.mxu0 0
    %287 = vmatpush1.bf16.msra.mxu0 0
    %288 = vmatprep.subr.bf16.mxu0 0
    %289 = vmatpush1.bf16.msra.mxu0 0
    %290 = vmatprep.subr.bf16.mxu0 0
    %291 = vmatpush1.bf16.msra.mxu0 0
    %292 = vmatprep.mubr.bf16.mxu0 0
    %293 = vmatmul.mubr.bf16.gmra.mrb[0].mxu0 %v98
    %v294 = vpop.f32.mrb[0].mxu0
    %v295 = vadd.f32 0.0, %v294
    %v296 = vpop.f32.mrb[0].mxu0
    %v297 = vadd.f32 0.0, %v296
    %v298 = vpop.f32.mrb[0].mxu0
    %v299 = vadd.f32 0.0, %v298
    %v300 = vpop.f32.mrb[0].mxu0
    %v301 = vadd.f32 0.0, %v300
    %302 = vdwg.mxu0
    %303 = vmatprep.subr.bf16.mxu0 %v199
    %304 = vmatpush1.bf16.msra.mxu0 %v198
    %305 = vmatprep.subr.bf16.mxu0 %v203
    %306 = vmatpush1.bf16.msra.mxu0 %v202
    %307 = vmatprep.subr.bf16.mxu0 %v207
    %308 = vmatpush1.bf16.msra.mxu0 %v206
    %309 = vmatprep.subr.bf16.mxu0 %v211
    %310 = vmatpush1.bf16.msra.mxu0 %v210
    %311 = vmatprep.subr.bf16.mxu0 %v215
    %312 = vmatpush1.bf16.msra.mxu0 %v214
    %313 = vmatprep.subr.bf16.mxu0 %v219
    %314 = vmatpush1.bf16.msra.mxu0 %v218
    %315 = vmatprep.subr.bf16.mxu0 %v223
    %316 = vmatpush1.bf16.msra.mxu0 %v222
    %317 = vmatprep.subr.bf16.mxu0 %v227
    %318 = vmatpush1.bf16.msra.mxu0 %v226
    %319 = vmatprep.subr.bf16.mxu0 0
    %320 = vmatpush1.bf16.msra.mxu0 0
    %321 = vmatprep.subr.bf16.mxu0 0
    %322 = vmatpush1.bf16.msra.mxu0 0
    %323 = vmatprep.subr.bf16.mxu0 0
    %324 = vmatpush1.bf16.msra.mxu0 0
    %325 = vmatprep.subr.bf16.mxu0 0
    %326 = vmatpush1.bf16.msra.mxu0 0
    %327 = vmatprep.subr.bf16.mxu0 0
    %328 = vmatpush1.bf16.msra.mxu0 0
    %329 = vmatprep.subr.bf16.mxu0 0
    %330 = vmatpush1.bf16.msra.mxu0 0
    %331 = vmatprep.subr.bf16.mxu0 0
    %332 = vmatpush1.bf16.msra.mxu0 0
    %333 = vmatprep.subr.bf16.mxu0 0
    %334 = vmatpush1.bf16.msra.mxu0 0
    %335 = vmatprep.mubr.bf16.mxu0 0
    %336 = vmatmul.mubr.bf16.gmra.mrb[0].mxu0 %v98
    %v337 = vpop.f32.mrb[0].mxu0
    %v338 = vadd.f32 0.0, %v337
    %v339 = vpop.f32.mrb[0].mxu0
    %v340 = vadd.f32 0.0, %v339
    %v341 = vpop.f32.mrb[0].mxu0
    %v342 = vadd.f32 0.0, %v341
    %v343 = vpop.f32.mrb[0].mxu0
    %v344 = vadd.f32 0.0, %v343
    %345 = vdwg.mxu0
    %vm346 = vcmask 130048
    %v348 = vsel %vm346, 1.0, 0
    %350 = vmatprep.subr.mxu0 %v297
    %351 = vmatpush1.msra.mxu0 %v295
    %352 = vmatprep.subr.mxu0 %v301
    %353 = vmatpush1.msra.mxu0 %v299
    %354 = vmatprep.subr.mxu0 0.0
    %355 = vmatpush1.msra.mxu0 0.0
    %356 = vmatprep.subr.mxu0 0.0
    %357 = vmatpush1.msra.mxu0 0.0
    %358 = vmatprep.subr.mxu0 0.0
    %359 = vmatpush1.msra.mxu0 0.0
    %360 = vmatprep.subr.mxu0 0.0
    %361 = vmatpush1.msra.mxu0 0.0
    %362 = vmatprep.subr.mxu0 0.0
    %363 = vmatpush1.msra.mxu0 0.0
    %364 = vmatprep.subr.mxu0 0.0
    %365 = vmatpush1.msra.mxu0 0.0
    %366 = vmatprep.subr.mxu0 0.0
    %367 = vmatpush1.msra.mxu0 0.0
    %368 = vmatprep.subr.mxu0 0.0
    %369 = vmatpush1.msra.mxu0 0.0
    %370 = vmatprep.subr.mxu0 0.0
    %371 = vmatpush1.msra.mxu0 0.0
    %372 = vmatprep.subr.mxu0 0.0
    %373 = vmatpush1.msra.mxu0 0.0
    %374 = vmatprep.subr.mxu0 0.0
    %375 = vmatpush1.msra.mxu0 0.0
    %376 = vmatprep.subr.mxu0 0.0
    %377 = vmatpush1.msra.mxu0 0.0
    %378 = vmatprep.subr.mxu0 0.0
    %379 = vmatpush1.msra.mxu0 0.0
    %380 = vmatprep.subr.mxu0 0.0
    %381 = vmatpush1.msra.mxu0 0.0
    %382 = vmatprep.subr.mxu0 0.0
    %383 = vmatpush1.msra.mxu0 0.0
    %384 = vmatprep.subr.mxu0 0.0
    %385 = vmatpush1.msra.mxu0 0.0
    %386 = vmatprep.subr.mxu0 0.0
    %387 = vmatpush1.msra.mxu0 0.0
    %388 = vmatprep.subr.mxu0 0.0
    %389 = vmatpush1.msra.mxu0 0.0
    %390 = vmatprep.subr.mxu0 0.0
    %391 = vmatpush1.msra.mxu0 0.0
    %392 = vmatprep.subr.mxu0 0.0
    %393 = vmatpush1.msra.mxu0 0.0
    %394 = vmatprep.subr.mxu0 0.0
    %395 = vmatpush1.msra.mxu0 0.0
    %396 = vmatprep.subr.mxu0 0.0
    %397 = vmatpush1.msra.mxu0 0.0
    %398 = vmatprep.subr.mxu0 0.0
    %399 = vmatpush1.msra.mxu0 0.0
    %400 = vmatprep.subr.mxu0 0.0
    %401 = vmatpush1.msra.mxu0 0.0
    %402 = vmatprep.subr.mxu0 0.0
    %403 = vmatpush1.msra.mxu0 0.0
    %404 = vmatprep.subr.mxu0 0.0
    %405 = vmatpush1.msra.mxu0 0.0
    %406 = vmatprep.subr.mxu0 0.0
    %407 = vmatpush1.msra.mxu0 0.0
    %408 = vmatprep.subr.mxu0 0.0
    %409 = vmatpush1.msra.mxu0 0.0
    %410 = vmatprep.subr.mxu0 0.0
    %411 = vmatpush1.msra.mxu0 0.0
    %412 = vmatprep.subr.mxu0 0.0
    %413 = vmatpush1.msra.mxu0 0.0
    %414 = vmatprep.mubr.f32.mxu0 0.0
    %415 = vmatmul.mubr.f32.gmra.mrb[0].mxu0 %v348
    %v416 = vpop.f32.mrb[0].mxu0
    %v417 = vadd.f32 0.0, %v416
    %v418 = vpop.f32.mrb[0].mxu0
    %v419 = vadd.f32 0.0, %v418
    %420 = vdwg.mxu0
    %v421 = vmul.f32 %v295, %v295
    %v422 = vmul.f32 %v297, %v297
    %v423 = vmul.f32 %v299, %v299
    %v424 = vmul.f32 %v301, %v301
    %425 = vmatprep.subr.mxu0 %v422
    %426 = vmatpush1.msra.mxu0 %v421
    %427 = vmatprep.subr.mxu0 %v424
    %428 = vmatpush1.msra.mxu0 %v423
    %429 = vmatprep.subr.mxu0 0.0
    %430 = vmatpush1.msra.mxu0 0.0
    %431 = vmatprep.subr.mxu0 0.0
    %432 = vmatpush1.msra.mxu0 0.0
    %433 = vmatprep.subr.mxu0 0.0
    %434 = vmatpush1.msra.mxu0 0.0
    %435 = vmatprep.subr.mxu0 0.0
    %436 = vmatpush1.msra.mxu0 0.0
    %437 = vmatprep.subr.mxu0 0.0
    %438 = vmatpush1.msra.mxu0 0.0
    %439 = vmatprep.subr.mxu0 0.0
    %440 = vmatpush1.msra.mxu0 0.0
    %441 = vmatprep.subr.mxu0 0.0
    %442 = vmatpush1.msra.mxu0 0.0
    %443 = vmatprep.subr.mxu0 0.0
    %444 = vmatpush1.msra.mxu0 0.0
    %445 = vmatprep.subr.mxu0 0.0
    %446 = vmatpush1.msra.mxu0 0.0
    %447 = vmatprep.subr.mxu0 0.0
    %448 = vmatpush1.msra.mxu0 0.0
    %449 = vmatprep.subr.mxu0 0.0
    %450 = vmatpush1.msra.mxu0 0.0
    %451 = vmatprep.subr.mxu0 0.0
    %452 = vmatpush1.msra.mxu0 0.0
    %453 = vmatprep.subr.mxu0 0.0
    %454 = vmatpush1.msra.mxu0 0.0
    %455 = vmatprep.subr.mxu0 0.0
    %456 = vmatpush1.msra.mxu0 0.0
    %457 = vmatprep.subr.mxu0 0.0
    %458 = vmatpush1.msra.mxu0 0.0
    %459 = vmatprep.subr.mxu0 0.0
    %460 = vmatpush1.msra.mxu0 0.0
    %461 = vmatprep.subr.mxu0 0.0
    %462 = vmatpush1.msra.mxu0 0.0
    %463 = vmatprep.subr.mxu0 0.0
    %464 = vmatpush1.msra.mxu0 0.0
    %465 = vmatprep.subr.mxu0 0.0
    %466 = vmatpush1.msra.mxu0 0.0
    %467 = vmatprep.subr.mxu0 0.0
    %468 = vmatpush1.msra.mxu0 0.0
    %469 = vmatprep.subr.mxu0 0.0
    %470 = vmatpush1.msra.mxu0 0.0
    %471 = vmatprep.subr.mxu0 0.0
    %472 = vmatpush1.msra.mxu0 0.0
    %473 = vmatprep.subr.mxu0 0.0
    %474 = vmatpush1.msra.mxu0 0.0
    %475 = vmatprep.subr.mxu0 0.0
    %476 = vmatpush1.msra.mxu0 0.0
    %477 = vmatprep.subr.mxu0 0.0
    %478 = vmatpush1.msra.mxu0 0.0
    %479 = vmatprep.subr.mxu0 0.0
    %480 = vmatpush1.msra.mxu0 0.0
    %481 = vmatprep.subr.mxu0 0.0
    %482 = vmatpush1.msra.mxu0 0.0
    %483 = vmatprep.subr.mxu0 0.0
    %484 = vmatpush1.msra.mxu0 0.0
    %485 = vmatprep.subr.mxu0 0.0
    %486 = vmatpush1.msra.mxu0 0.0
    %487 = vmatprep.subr.mxu0 0.0
    %488 = vmatpush1.msra.mxu0 0.0
    %489 = vmatprep.mubr.f32.mxu0 0.0
    %490 = vmatmul.mubr.f32.gmra.mrb[0].mxu0 %v348
    %v491 = vpop.f32.mrb[0].mxu0
    %v492 = vadd.f32 0.0, %v491
    %v493 = vpop.f32.mrb[0].mxu0
    %v494 = vadd.f32 0.0, %v493
    %495 = vdwg.mxu0
    %v496 = vmax.f32 %v295, %v299
    %v497 = vrot.slane %v496, 4
    %v498 = vmax.f32 %v496, %v497
    %v499 = vrot.slane %v498, 2
    %v500 = vmax.f32 %v498, %v499
    %v501 = vrot.slane %v500, 1
    %v502 = vmax.f32 %v500, %v501
    %v503 = vmax.f32 %v297, %v301
    %v504 = vrot.slane %v503, 4
    %v505 = vmax.f32 %v503, %v504
    %v506 = vrot.slane %v505, 2
    %v507 = vmax.f32 %v505, %v506
    %v508 = vrot.slane %v507, 1
    %v509 = vmax.f32 %v507, %v508
    %v510 = vmin.f32 %v295, %v299
    %v511 = vrot.slane %v510, 4
    %v512 = vmin.f32 %v510, %v511
    %v513 = vrot.slane %v512, 2
    %v514 = vmin.f32 %v512, %v513
    %v515 = vrot.slane %v514, 1
    %v516 = vmin.f32 %v514, %v515
    %v517 = vmin.f32 %v297, %v301
    %v518 = vrot.slane %v517, 4
    %v519 = vmin.f32 %v517, %v518
    %v520 = vrot.slane %v519, 2
    %v521 = vmin.f32 %v519, %v520
    %v522 = vrot.slane %v521, 1
    %v523 = vmin.f32 %v521, %v522
    %v526 = vrot.slane %v492, 7
    %v527 = vrot.slane %v494, 7
    %vm530 = vcmask 1040384
    %v531 = vsel %vm530, %v417, %v526
    %v532 = vsel %vm530, %v419, %v527
    %vm533 = vcmask 1041408
    %v534 = vsel %vm533, %v531, %v502
    %v535 = vsel %vm533, %v532, %v509
    %vm536 = vcmask 1042432
    %v537 = vsel %vm536, %v534, %v516
    %v538 = vsel %vm536, %v535, %v523
    %v541 = vcombine.low %v537, %v538
    %543 = vst [vmem:[#allocation9] sm:$0xff] %v541
    %v544 = vxor.u32 %v295, 2147483648
    %v545 = vxor.u32 %v297, 2147483648
    %v546 = vxor.u32 %v299, 2147483648
    %v547 = vxor.u32 %v301, 2147483648
    %v548 = vmul.f32 %v544, 1.442695
    %v549 = vpow.pop %v548
    %v550 = vmul.f32 %v545, 1.442695
    %v551 = vpow.pop %v550
    %v552 = vmul.f32 %v546, 1.442695
    %v553 = vpow.pop %v552
    %v554 = vmul.f32 %v547, 1.442695
    %v555 = vpow.pop %v554
    %v556 = vadd.f32 %v549, 1.0
    %v557 = vadd.f32 %v551, 1.0
    %v558 = vadd.f32 %v553, 1.0
    %v559 = vadd.f32 %v555, 1.0
    %v560 = vrcp.pop %v556
    %v561 = vmul.f32 1.0, %v560
    %v562 = vrcp.pop %v557
    %v563 = vmul.f32 1.0, %v562
    %v564 = vrcp.pop %v558
    %v565 = vmul.f32 1.0, %v564
    %v566 = vrcp.pop %v559
    %v567 = vmul.f32 1.0, %v566
    %v568 = vmul.f32 %v295, %v561
    %v569 = vmul.f32 %v297, %v563
    %v570 = vmul.f32 %v299, %v565
    %v571 = vmul.f32 %v301, %v567
    %v572 = vmul.f32 %v568, %v338
    %v573 = vmul.f32 %v569, %v340
    %v574 = vmul.f32 %v570, %v342
    %v575 = vmul.f32 %v571, %v344
    %v576 = vpack.c.bf16 %v574, %v572
    %v577 = vpack.c.bf16 %v575, %v573
    %v578 = vld [vmem:[#allocation7] sm:$0xf]
    %v579 = vld [vmem:[#allocation7 + $0x4] sm:$0xf]
    %v580 = vld [vmem:[#allocation7 + $0x8] sm:$0xf]
    %v581 = vld [vmem:[#allocation7 + $0xc] sm:$0xf]
    %v582 = vld [vmem:[#allocation7 + $0x10] sm:$0xf]
    %v583 = vld [vmem:[#allocation7 + $0x14] sm:$0xf]
    %v584 = vld [vmem:[#allocation7 + $0x18] sm:$0xf]
    %v585 = vld [vmem:[#allocation7 + $0x1c] sm:$0xf]
    %v586 = vld [vmem:[#allocation7 + $0x20] sm:$0xf]
    %v587 = vld [vmem:[#allocation7 + $0x24] sm:$0xf]
    %v588 = vld [vmem:[#allocation7 + $0x28] sm:$0xf]
    %v589 = vld [vmem:[#allocation7 + $0x2c] sm:$0xf]
    %v590 = vld [vmem:[#allocation7 + $0x30] sm:$0xf]
    %v591 = vld [vmem:[#allocation7 + $0x34] sm:$0xf]
    %v592 = vld [vmem:[#allocation7 + $0x38] sm:$0xf]
    %v593 = vld [vmem:[#allocation7 + $0x3c] sm:$0xf]
    %v594 = vld [vmem:[#allocation7 + $0x40] sm:$0xf]
    %v595 = vld [vmem:[#allocation7 + $0x44] sm:$0xf]
    %v596 = vld [vmem:[#allocation7 + $0x48] sm:$0xf]
    %v597 = vld [vmem:[#allocation7 + $0x4c] sm:$0xf]
    %v598 = vld [vmem:[#allocation7 + $0x50] sm:$0xf]
    %v599 = vld [vmem:[#allocation7 + $0x54] sm:$0xf]
    %v600 = vld [vmem:[#allocation7 + $0x58] sm:$0xf]
    %v601 = vld [vmem:[#allocation7 + $0x5c] sm:$0xf]
    %v602 = vld [vmem:[#allocation7 + $0x60] sm:$0xf]
    %v603 = vld [vmem:[#allocation7 + $0x64] sm:$0xf]
    %v604 = vld [vmem:[#allocation7 + $0x68] sm:$0xf]
    %v605 = vld [vmem:[#allocation7 + $0x6c] sm:$0xf]
    %v606 = vld [vmem:[#allocation7 + $0x70] sm:$0xf]
    %v607 = vld [vmem:[#allocation7 + $0x74] sm:$0xf]
    %v608 = vld [vmem:[#allocation7 + $0x78] sm:$0xf]
    %v609 = vld [vmem:[#allocation7 + $0x7c] sm:$0xf]
    %v642 = vunpack.c.l.b16 %v578
    %v643 = vunpack.c.l.b16 %v579
    %v644 = vunpack.c.l.b16 %v580
    %v645 = vunpack.c.l.b16 %v581
    %v646 = vunpack.c.l.b16 %v582
    %v647 = vunpack.c.l.b16 %v583
    %v648 = vunpack.c.l.b16 %v584
    %v649 = vunpack.c.l.b16 %v585
    %v650 = vunpack.c.l.b16 %v586
    %v651 = vunpack.c.l.b16 %v587
    %v652 = vunpack.c.l.b16 %v588
    %v653 = vunpack.c.l.b16 %v589
    %v654 = vunpack.c.l.b16 %v590
    %v655 = vunpack.c.l.b16 %v591
    %v656 = vunpack.c.l.b16 %v592
    %v657 = vunpack.c.l.b16 %v593
    %v658 = vunpack.c.l.b16 %v594
    %v659 = vunpack.c.l.b16 %v595
    %v660 = vunpack.c.l.b16 %v596
    %v661 = vunpack.c.l.b16 %v597
    %v662 = vunpack.c.l.b16 %v598
    %v663 = vunpack.c.l.b16 %v599
    %v664 = vunpack.c.l.b16 %v600
    %v665 = vunpack.c.l.b16 %v601
    %v666 = vunpack.c.l.b16 %v602
    %v667 = vunpack.c.l.b16 %v603
    %v668 = vunpack.c.l.b16 %v604
    %v669 = vunpack.c.l.b16 %v605
    %v670 = vunpack.c.l.b16 %v606
    %v671 = vunpack.c.l.b16 %v607
    %v672 = vunpack.c.l.b16 %v608
    %v673 = vunpack.c.l.b16 %v609
    %v674 = vpack.c.b16 %v643, %v642
    %v675 = vpack.c.b16 %v645, %v644
    %v676 = vpack.c.b16 %v647, %v646
    %v677 = vpack.c.b16 %v649, %v648
    %v678 = vpack.c.b16 %v651, %v650
    %v679 = vpack.c.b16 %v653, %v652
    %v680 = vpack.c.b16 %v655, %v654
    %v681 = vpack.c.b16 %v657, %v656
    %v682 = vpack.c.b16 %v659, %v658
    %v683 = vpack.c.b16 %v661, %v660
    %v684 = vpack.c.b16 %v663, %v662
    %v685 = vpack.c.b16 %v665, %v664
    %v686 = vpack.c.b16 %v667, %v666
    %v687 = vpack.c.b16 %v669, %v668
    %v688 = vpack.c.b16 %v671, %v670
    %v689 = vpack.c.b16 %v673, %v672
    %706 = vmatprep.subr.bf16.mxu0 0
    %707 = vmatpush1.bf16.msra.mxu0 %v674
    %708 = vmatprep.subr.bf16.mxu0 0
    %709 = vmatpush1.bf16.msra.mxu0 %v675
    %710 = vmatprep.subr.bf16.mxu0 0
    %711 = vmatpush1.bf16.msra.mxu0 %v676
    %712 = vmatprep.subr.bf16.mxu0 0
    %713 = vmatpush1.bf16.msra.mxu0 %v677
    %714 = vmatprep.subr.bf16.mxu0 0
    %715 = vmatpush1.bf16.msra.mxu0 %v678
    %716 = vmatprep.subr.bf16.mxu0 0
    %717 = vmatpush1.bf16.msra.mxu0 %v679
    %718 = vmatprep.subr.bf16.mxu0 0
    %719 = vmatpush1.bf16.msra.mxu0 %v680
    %720 = vmatprep.subr.bf16.mxu0 0
    %721 = vmatpush1.bf16.msra.mxu0 %v681
    %722 = vmatprep.subr.bf16.mxu0 0
    %723 = vmatpush1.bf16.msra.mxu0 %v682
    %724 = vmatprep.subr.bf16.mxu0 0
    %725 = vmatpush1.bf16.msra.mxu0 %v683
    %726 = vmatprep.subr.bf16.mxu0 0
    %727 = vmatpush1.bf16.msra.mxu0 %v684
    %728 = vmatprep.subr.bf16.mxu0 0
    %729 = vmatpush1.bf16.msra.mxu0 %v685
    %730 = vmatprep.subr.bf16.mxu0 0
    %731 = vmatpush1.bf16.msra.mxu0 %v686
    %732 = vmatprep.subr.bf16.mxu0 0
    %733 = vmatpush1.bf16.msra.mxu0 %v687
    %734 = vmatprep.subr.bf16.mxu0 0
    %735 = vmatpush1.bf16.msra.mxu0 %v688
    %736 = vmatprep.subr.bf16.mxu0 0
    %737 = vmatpush1.bf16.msra.mxu0 %v689
    %738 = vmatprep.mubr.bf16.mxu0 %v577
    %739 = vmatmul.mubr.bf16.gmra.mrb[0].mxu0 %v576
    %v740 = vpop.f32.mrb[0].mxu0
    %v741 = vadd.f32 0.0, %v740
    %v742 = vpop.f32.mrb[0].mxu0
    %v743 = vpop.f32.mrb[0].mxu0
    %v744 = vadd.f32 0.0, %v743
    %v745 = vpop.f32.mrb[0].mxu0
    %746 = vdwg.mxu0
    %p747 = scmp.eq.s32.totalorder 0, 0
    // Predicated region
    $region26: #{_mlp_pallas.1} parent=1 // pred_check
      %p748 = pneg %p747
    $region27: #{_mlp_pallas.1} parent=1 // pred_check_branch
      %750 = sbr.rel (%p748) target = $region29
    $region28: #{_mlp_pallas.1} parent=1 // pred_region
      %751 = vst [vmem:[#allocation8] sm:$0xff] %v741
      %752 = vst [vmem:[#allocation8 + $0x8] sm:$0xff] %v744
    $region29: #{_mlp_pallas.1} parent=1 // pred_fallthru
      _
    %p753 = scmp.gt.s32.totalorder 0, 0
    // Predicated region
    $region30: #{_mlp_pallas.1} parent=1 // pred_check
      %p754 = pneg %p753
    $region31: #{_mlp_pallas.1} parent=1 // pred_check_branch
      %756 = sbr.rel (%p754) target = $region33
    $region32: #{_mlp_pallas.1} parent=1 // pred_region
      %v757 = vld [vmem:[#allocation8] sm:$0xff]
      %v758 = vld [vmem:[#allocation8 + $0x8] sm:$0xff]
      %v759 = vadd.f32 %v757, %v741
      %v760 = vadd.f32 %v758, %v744
      %761 = vst [vmem:[#allocation8] sm:$0xff] %v759
      %762 = vst [vmem:[#allocation8 + $0x8] sm:$0xff] %v760
    $region33: #{_mlp_pallas.1} parent=1 // pred_fallthru
      _
    // Predicated region
    $region34: #{_mlp_pallas.1} parent=1 // pred_check
      _
    $region35: #{_mlp_pallas.1} parent=1 // pred_check_branch
      %764 = sbr.rel (0) target = $region37
    $region36: #{_mlp_pallas.1} parent=1 // pred_region
      %s766 = ssub.s32 256, 256
      %767 = vsyncadd [#allocation4], %s766
      %s768 = sshll.u32 [#allocation8], 4
      %s769 = int_to_ptr.vmem [resolvable:$true] %s768
      %774 = dma.vmem_to_hbm [thread:$0]  %s769, 256, %s3, [#allocation4], 128, 128, 8
    $region37: #{_mlp_pallas.1} parent=1 // pred_fallthru
      _
    // Predicated region
    $region38: #{_mlp_pallas.1} parent=1 // pred_check
      _
    $region39: #{_mlp_pallas.1} parent=1 // pred_check_branch
      %776 = sbr.rel (0) target = $region41
    $region40: #{_mlp_pallas.1} parent=1 // pred_region
      %s778 = ssub.s32 128, 128
      %779 = vsyncadd [#allocation10], %s778
      %s781 = sshll.u32 [#allocation9], 4
      %s782 = int_to_ptr.vmem [resolvable:$true] %s781
      %784 = dma.vmem_to_hbm [thread:$0]  %s782, 128, %s4, [#allocation10]
    $region41: #{_mlp_pallas.1} parent=1 // pred_fallthru
      _
    // Predicated region
    $region42: #{_mlp_pallas.1} parent=1 // pred_check
      _
    $region43: #{_mlp_pallas.1} parent=1 // pred_check_branch
      %786 = sbr.rel (0) target = $region45
    $region44: #{_mlp_pallas.1} parent=1 // pred_region
      %787 = dma.done [#allocation4], 256
    $region45: #{_mlp_pallas.1} parent=1 // pred_fallthru
      _
    // Predicated region
    $region46: #{_mlp_pallas.1} parent=1 // pred_check
      _
    $region47: #{_mlp_pallas.1} parent=1 // pred_check_branch
      %789 = sbr.rel (0) target = $region49
    $region48: #{_mlp_pallas.1} parent=1 // pred_region
      %790 = dma.done [#allocation10], 128
    $region49: #{_mlp_pallas.1} parent=1 // pred_fallthru
      _
    %791 = vsyncpa [#allocation3], 1
    %792 = vsyncpa [#allocation6], 1
    %793 = vsyncpa [#allocation4], 1
    %794 = vsyncpa [#allocation10], 1

</llo_original>
